<compile_context>
chip_gen: v6e
topology: v6e:2x2x1
jax: 0.10.0
libtpu: 0.0.40
codegen_flags: <defaults>
</compile_context>

<pallas_src>
import functools

import jax
import jax.numpy as jnp
from jax.experimental import pallas as pl
from jax.experimental.pallas import tpu as pltpu

F_IN = 7      # fixed by the module: nn.LSTM(7, hidden_size, ...)
F_PAD = 8     # input features padded 7 -> 8; the pad slot carries the ones row
SECTION = 128 # every slab section starts on a 128-lane boundary


def _round_up(a, b):
    return (a + b - 1) // b * b


def _offsets(hidden_size, num_layers):
    """Column offsets of the packed parameter slab (all 128-aligned)."""
    L = num_layers
    n_bias_sec = 1 if L > 1 else 0
    off_b = L * SECTION                      # biases of layers 1..L-1
    off_fc = (L + n_bias_sec) * SECTION      # fc weight (rows 0:H) + fc bias (row H)
    n_cols = off_fc + SECTION
    return off_b, off_fc, n_cols


def _igo(m, H):
    """Select the live [i, g, o] gate rows from a PyTorch-ordered [i,f,g,o] tensor."""
    return jnp.concatenate([m[0:H], m[2 * H:3 * H], m[3 * H:4 * H]], axis=0)


def _sigmoid(x):
    # tanh-based sigmoid: stays on the EUP transcendental slot.
    return 0.5 * (jnp.tanh(0.5 * x) + 1.0)


def lstmnn_kernel(xT_ref, params_ref, out_ref, *, hidden_size, num_layers):
    H = hidden_size
    L = num_layers
    off_b, off_fc, _ = _offsets(H, L)

    def cell(gates):
        # gates: (3H, Wb) with rows [i, g, o]; forget gate dropped (c_0 == 0).
        i = _sigmoid(gates[0 * H:1 * H, :])
        g = jnp.tanh(gates[1 * H:2 * H, :])
        o = _sigmoid(gates[2 * H:3 * H, :])
        c = i * g                       # c_1 = f*c_0 + i*g with c_0 = 0
        return o * jnp.tanh(c)          # h_1, shape (H, Wb)

    # ---- layer 0: (3H, 8) @ (8, Wb); bias folded in via the ones row of xT ----
    gates = jnp.dot(params_ref[:, 0:F_PAD], xT_ref[...],
                    preferred_element_type=jnp.float32)
    h = cell(gates)

    # ---- layers 1..L-1 ----
    # TODO(synk): inter-layer dropout (train mode) not implemented; this is
    # inference-mode (identity dropout) semantics.
    for l in range(1, L):
        w = params_ref[:, l * SECTION:l * SECTION + H]            # (3H, H), aligned
        gates = jnp.dot(w, h, preferred_element_type=jnp.float32)
        gates = gates + params_ref[:, off_b + (l - 1):off_b + l]  # fused bias
        h = cell(gates)

    # ---- fc = Linear(H, 1): VPU multiply + sublane reduce (no N=1 MXU op) ----
    fc_w = params_ref[0:H, off_fc:off_fc + 1]                     # (H, 1)
    fc_b = params_ref[H:H + 1, off_fc:off_fc + 1]                 # (1, 1)
    logit = jnp.sum(h * fc_w, axis=0, keepdims=True) + fc_b       # (1, Wb)
    out_ref[...] = logit.astype(out_ref.dtype)


def pack_params(lstm_params, fc_w, fc_b, hidden_size, num_layers):
    """Pack all parameters into one (3H, n_cols) f32 slab. Call ONCE at init.

    128-aligned sections:
      sec 0            : w_ih0 (live rows), cols 0..6; fused layer-0 bias in col 7
      sec l (1..L-1)   : w_ih of layer l (live rows), cols 0..H-1
      sec L (if L > 1) : fused bias of layer l at column (l-1)
      last section     : fc weight in rows 0..H-1 of col 0, fc bias at row H
    w_hh and the forget-gate rows are intentionally absent (dead for seq=1,
    zero initial state).
    """
    H, L = hidden_size, num_layers
    assert H % 8 == 0, "hidden_size must be a multiple of 8 for the 3H-row packing"
    off_b, off_fc, n_cols = _offsets(H, L)

    slab = jnp.zeros((3 * H, n_cols), jnp.float32)
    w_ih0, _, b_ih0, b_hh0 = lstm_params[0]
    slab = slab.at[:, 0:F_IN].set(_igo(w_ih0.astype(jnp.float32), H))
    slab = slab.at[:, F_IN].set(_igo((b_ih0 + b_hh0).astype(jnp.float32), H))
    for l in range(1, L):
        w_ih, _, b_ih, b_hh = lstm_params[l]
        slab = slab.at[:, l * SECTION:l * SECTION + H].set(
            _igo(w_ih.astype(jnp.float32), H))
        slab = slab.at[:, off_b + (l - 1)].set(
            _igo((b_ih + b_hh).astype(jnp.float32), H))
    slab = slab.at[0:H, off_fc].set(fc_w[0].astype(jnp.float32))
    slab = slab.at[H, off_fc].set(fc_b[0].astype(jnp.float32))
    return slab


@functools.partial(jax.jit, static_argnames=("hidden_size", "num_layers"))
def lstmnn_forward(x, params, hidden_size, num_layers):
    H, L = hidden_size, num_layers
    _, _, n_cols = _offsets(H, L)
    B = x.shape[0]

    # Batch lives on the lane axis, tiled by Wb (>= 256 ideally on v6e/v7x).
    B_pad128 = _round_up(B, 128)
    Wb = 512 if B_pad128 >= 512 else B_pad128
    B_pad = _round_up(B_pad128, Wb)
    grid = (B_pad // Wb,)

    # xT: (8, B_pad); row 7 = ones so the layer-0 fused bias rides the matmul.
    # Transpose/pad happen inside this jit (fused); negligible at small B.
    # TODO(synk): for very large B, move this transpose into the kernel
    # (accept (B,8) blocks, XLU-transpose per tile) to hide the HBM pass.
    xT = jnp.zeros((F_PAD, B_pad), jnp.float32)
    xT = xT.at[F_IN, :].set(1.0)
    xT = xT.at[0:F_IN, 0:B].set(x.astype(jnp.float32).T)

    kernel = functools.partial(lstmnn_kernel, hidden_size=H, num_layers=L)
    out = pl.pallas_call(
        kernel,
        out_shape=jax.ShapeDtypeStruct((1, B_pad), jnp.float32),  # lane-dense
        grid=grid,
        in_specs=[
            pl.BlockSpec((F_PAD, Wb), lambda i: (0, i)),      # batch-tiled x
            pl.BlockSpec((3 * H, n_cols), lambda i: (0, 0)),  # resident slab
        ],
        out_specs=pl.BlockSpec((1, Wb), lambda i: (0, i)),
        compiler_params=pltpu.CompilerParams(
            dimension_semantics=("parallel",)),               # megacore on v7x
    )(xT, params)
    return out[:, 0:B].T  # (B, 1)


def reference_forward(x, lstm_params, fc_w, fc_b, hidden_size, num_layers):
    H = hidden_size
    inp = x
    h = None
    for (w_ih, w_hh, b_ih, b_hh) in lstm_params:
        gates = inp @ w_ih.T + b_ih + b_hh          # h_0 = c_0 = 0, seq_len = 1
        i = jax.nn.sigmoid(gates[:, 0 * H:1 * H])
        g = jnp.tanh(gates[:, 2 * H:3 * H])
        o = jax.nn.sigmoid(gates[:, 3 * H:4 * H])
        h = o * jnp.tanh(i * g)
        inp = h
    return h @ fc_w.T + fc_b


if __name__ == "__main__":
    B, HIDDEN, LAYERS = 8, 32, 2   # batch, hidden_size, num_layers

    key = jax.random.PRNGKey(0)
    keys = jax.random.split(key, 4 * LAYERS + 3)
    k = 1.0 / jnp.sqrt(HIDDEN)

    x = jax.random.normal(keys[0], (B, F_IN), dtype=jnp.float32)

    lstm_params = []
    ki = 1
    for l in range(LAYERS):
        in_sz = F_IN if l == 0 else HIDDEN
        w_ih = jax.random.uniform(keys[ki + 0], (4 * HIDDEN, in_sz),
                                  minval=-k, maxval=k, dtype=jnp.float32)
        w_hh = jax.random.uniform(keys[ki + 1], (4 * HIDDEN, HIDDEN),
                                  minval=-k, maxval=k, dtype=jnp.float32)
        b_ih = jax.random.uniform(keys[ki + 2], (4 * HIDDEN,),
                                  minval=-k, maxval=k, dtype=jnp.float32)
        b_hh = jax.random.uniform(keys[ki + 3], (4 * HIDDEN,),
                                  minval=-k, maxval=k, dtype=jnp.float32)
        lstm_params.append((w_ih, w_hh, b_ih, b_hh))
        ki += 4

    fc_w = jax.random.uniform(keys[ki], (1, HIDDEN),
                              minval=-k, maxval=k, dtype=jnp.float32)
    fc_b = jax.random.uniform(keys[ki + 1], (1,),
                              minval=-k, maxval=k, dtype=jnp.float32)

    # Pack once at init (hoisted out of the per-call path).
    params = jax.block_until_ready(
        pack_params(lstm_params, fc_w, fc_b, HIDDEN, LAYERS))

    out = lstmnn_forward(x, params, HIDDEN, LAYERS)
    out = jax.block_until_ready(out)

    ref = reference_forward(x, lstm_params, fc_w, fc_b, HIDDEN, LAYERS)
    assert out.shape == (B, 1), out.shape
    assert jnp.allclose(out, ref, atol=1e-4, rtol=1e-4), (out, ref)

    print("KERNEL_OK")
</pallas_src>

<mosaic_0001>
module attributes {stable_mosaic.version = 11 : i64} {
  func.func @lstmnn_kernel(%arg0: i32, %arg1: memref<8x128xf32, #tpu.memory_space<vmem>>, %arg2: memref<96x512xf32, #tpu.memory_space<vmem>>, %arg3: memref<1x128xf32, #tpu.memory_space<vmem>>) attributes {dimension_semantics = [#tpu.dimension_semantics<parallel>], iteration_bounds = array<i64: 1>, scalar_prefetch = 0 : i64, scratch_operands = 0 : i64, tpu.core_type = #tpu.core_type<tc>, window_params = [{transform_indices = @transform_0, window_bounds = array<i64: 8, 128>}, {pipeline_mode = #tpu.pipeline_mode<synchronous>, transform_indices = @transform_1, window_bounds = array<i64: 96, 512>}, {transform_indices = @transform_2, window_bounds = array<i64: 1, 128>}]} {
    %c0 = arith.constant 0 : index
    %c0_0 = arith.constant 0 : index
    %0 = vector.load %arg2[%c0, %c0_0] : memref<96x512xf32, #tpu.memory_space<vmem>>, vector<96x8xf32>
    %c0_1 = arith.constant 0 : index
    %c0_2 = arith.constant 0 : index
    %1 = vector.load %arg1[%c0_1, %c0_2] : memref<8x128xf32, #tpu.memory_space<vmem>>, vector<8x128xf32>
    %cst = arith.constant dense<0.000000e+00> : vector<96x128xf32>
    %2 = tpu.matmul %0, %1, %cst {dimension_numbers = #tpu.dot_dimension_numbers<[1], [0], [0], [1], [0, 0, 1, 1], [], []>} : vector<96x8xf32>, vector<8x128xf32>, vector<96x128xf32> -> vector<96x128xf32>
    %3 = vector.extract_strided_slice %2 {offsets = [0, 0], sizes = [32, 128], strides = [1, 1]} : vector<96x128xf32> to vector<32x128xf32>
    %cst_3 = arith.constant 5.000000e-01 : f32
    %4 = vector.broadcast %cst_3 : f32 to vector<32x128xf32>
    %5 = arith.mulf %4, %3 : vector<32x128xf32>
    %6 = math.tanh %5 : vector<32x128xf32>
    %cst_4 = arith.constant 1.000000e+00 : f32
    %7 = vector.broadcast %cst_4 : f32 to vector<32x128xf32>
    %8 = arith.addf %6, %7 : vector<32x128xf32>
    %cst_5 = arith.constant 5.000000e-01 : f32
    %9 = vector.broadcast %cst_5 : f32 to vector<32x128xf32>
    %10 = arith.mulf %9, %8 : vector<32x128xf32>
    %11 = vector.extract_strided_slice %2 {offsets = [32, 0], sizes = [32, 128], strides = [1, 1]} : vector<96x128xf32> to vector<32x128xf32>
    %12 = math.tanh %11 : vector<32x128xf32>
    %13 = vector.extract_strided_slice %2 {offsets = [64, 0], sizes = [32, 128], strides = [1, 1]} : vector<96x128xf32> to vector<32x128xf32>
    %cst_6 = arith.constant 5.000000e-01 : f32
    %14 = vector.broadcast %cst_6 : f32 to vector<32x128xf32>
    %15 = arith.mulf %14, %13 : vector<32x128xf32>
    %16 = math.tanh %15 : vector<32x128xf32>
    %cst_7 = arith.constant 1.000000e+00 : f32
    %17 = vector.broadcast %cst_7 : f32 to vector<32x128xf32>
    %18 = arith.addf %16, %17 : vector<32x128xf32>
    %cst_8 = arith.constant 5.000000e-01 : f32
    %19 = vector.broadcast %cst_8 : f32 to vector<32x128xf32>
    %20 = arith.mulf %19, %18 : vector<32x128xf32>
    %21 = arith.mulf %10, %12 : vector<32x128xf32>
    %22 = math.tanh %21 : vector<32x128xf32>
    %23 = arith.mulf %20, %22 : vector<32x128xf32>
    %c0_9 = arith.constant 0 : index
    %c128 = arith.constant 128 : index
    %24 = vector.load %arg2[%c0_9, %c128] : memref<96x512xf32, #tpu.memory_space<vmem>>, vector<96x32xf32>
    %cst_10 = arith.constant dense<0.000000e+00> : vector<96x128xf32>
    %25 = tpu.matmul %24, %23, %cst_10 {dimension_numbers = #tpu.dot_dimension_numbers<[1], [0], [0], [1], [0, 0, 1, 1], [], []>} : vector<96x32xf32>, vector<32x128xf32>, vector<96x128xf32> -> vector<96x128xf32>
    %c0_11 = arith.constant 0 : index
    %c256 = arith.constant 256 : index
    %26 = vector.load %arg2[%c0_11, %c256] : memref<96x512xf32, #tpu.memory_space<vmem>>, vector<96x1xf32>
    %27 = vector.broadcast %26 : vector<96x1xf32> to vector<96x128xf32>
    %28 = arith.addf %25, %27 : vector<96x128xf32>
    %29 = vector.extract_strided_slice %28 {offsets = [0, 0], sizes = [32, 128], strides = [1, 1]} : vector<96x128xf32> to vector<32x128xf32>
    %cst_12 = arith.constant 5.000000e-01 : f32
    %30 = vector.broadcast %cst_12 : f32 to vector<32x128xf32>
    %31 = arith.mulf %30, %29 : vector<32x128xf32>
    %32 = math.tanh %31 : vector<32x128xf32>
    %cst_13 = arith.constant 1.000000e+00 : f32
    %33 = vector.broadcast %cst_13 : f32 to vector<32x128xf32>
    %34 = arith.addf %32, %33 : vector<32x128xf32>
    %cst_14 = arith.constant 5.000000e-01 : f32
    %35 = vector.broadcast %cst_14 : f32 to vector<32x128xf32>
    %36 = arith.mulf %35, %34 : vector<32x128xf32>
    %37 = vector.extract_strided_slice %28 {offsets = [32, 0], sizes = [32, 128], strides = [1, 1]} : vector<96x128xf32> to vector<32x128xf32>
    %38 = math.tanh %37 : vector<32x128xf32>
    %39 = vector.extract_strided_slice %28 {offsets = [64, 0], sizes = [32, 128], strides = [1, 1]} : vector<96x128xf32> to vector<32x128xf32>
    %cst_15 = arith.constant 5.000000e-01 : f32
    %40 = vector.broadcast %cst_15 : f32 to vector<32x128xf32>
    %41 = arith.mulf %40, %39 : vector<32x128xf32>
    %42 = math.tanh %41 : vector<32x128xf32>
    %cst_16 = arith.constant 1.000000e+00 : f32
    %43 = vector.broadcast %cst_16 : f32 to vector<32x128xf32>
    %44 = arith.addf %42, %43 : vector<32x128xf32>
    %cst_17 = arith.constant 5.000000e-01 : f32
    %45 = vector.broadcast %cst_17 : f32 to vector<32x128xf32>
    %46 = arith.mulf %45, %44 : vector<32x128xf32>
    %47 = arith.mulf %36, %38 : vector<32x128xf32>
    %48 = math.tanh %47 : vector<32x128xf32>
    %49 = arith.mulf %46, %48 : vector<32x128xf32>
    %c0_18 = arith.constant 0 : index
    %c384 = arith.constant 384 : index
    %50 = vector.load %arg2[%c0_18, %c384] : memref<96x512xf32, #tpu.memory_space<vmem>>, vector<32x1xf32>
    %c32 = arith.constant 32 : index
    %c384_19 = arith.constant 384 : index
    %51 = vector.load %arg2[%c32, %c384_19] : memref<96x512xf32, #tpu.memory_space<vmem>>, vector<1x1xf32>
    %52 = vector.broadcast %50 : vector<32x1xf32> to vector<32x128xf32>
    %53 = arith.mulf %49, %52 : vector<32x128xf32>
    %cst_20 = arith.constant dense<0.000000e+00> : vector<128xf32>
    %54 = vector.multi_reduction <add>, %53, %cst_20 [0] : vector<32x128xf32> to vector<128xf32>
    %55 = vector.shape_cast %54 : vector<128xf32> to vector<1x128xf32>
    %56 = vector.broadcast %51 : vector<1x1xf32> to vector<1x128xf32>
    %57 = arith.addf %55, %56 : vector<1x128xf32>
    %c0_21 = arith.constant 0 : index
    %c0_22 = arith.constant 0 : index
    %58 = vector.load %arg3[%c0_21, %c0_22] : memref<1x128xf32, #tpu.memory_space<vmem>>, vector<1x128xf32>
    tpu.vector_store %arg3[%c0_21, %c0_22], %57 {strides = array<i32>} : memref<1x128xf32, #tpu.memory_space<vmem>>, vector<1x128xf32>,
    return
  }
  func.func @transform_0(%arg0: i32) -> (i32, i32) {
    %c0_i32 = arith.constant 0 : i32
    %c0_i32_0 = arith.constant 0 : i32
    return %c0_i32, %arg0 : i32, i32
  }
  func.func @transform_1(%arg0: i32) -> (i32, i32) {
    %c0_i32 = arith.constant 0 : i32
    %c0_i32_0 = arith.constant 0 : i32
    %c0_i32_1 = arith.constant 0 : i32
    return %c0_i32, %c0_i32_0 : i32, i32
  }
  func.func @transform_2(%arg0: i32) -> (i32, i32) {
    %c0_i32 = arith.constant 0 : i32
    %c0_i32_0 = arith.constant 0 : i32
    return %c0_i32, %arg0 : i32, i32
  }
}

</mosaic_0001>

<llo_original>
// kernel: lstmnn_forward.1
$region0: #{lstmnn_forward.1}
  #allocation0 [shape = 'u32[]', space=smem, size = 0x4, offset = 0x4, fixed_abs, tag = 'smem constant byte address 0x4 - core index']
  #allocation1 [shape = 'u32[144,128]{1,0:T(1,128)}', space=vmem, size = 0x12000, scoped, tag = 'internal scratch']
  %s0 = inlined_call_operand.vmem [shape: f32[8,128], index: 0, kind: input, shape index: {}]
  %s1 = inlined_call_operand.hbm [shape: f32[96,512], index: 1, kind: input, shape index: {}]
  %s2 = inlined_call_operand.vmem [shape: f32[1,128], index: 2, kind: output, shape index: {}]
  %s3 = sld [smem:[#allocation0]]
  $region22: #{lstmnn_forward.1} parent=0
    _
  %s5 = ssub.s32 1, %s3
  %s6 = scalar_select 0, %s5, %s3
  $region1: #{lstmnn_forward.1} parent=0
    #allocation2 [shape = 'u8[196608]{0}', space=vmem, size = 0x30000, scoped, tag = 'input window, operand 1, single buffered']
    #allocation3 [shape = 's32[1]{0}', space=sflag, size = 0x4, scoped, tag = 'scoped memory for lstmnn_forward.1']
    %7 = vsyncpa [#allocation3], 0
    // Predicated region
    $region2: #{lstmnn_forward.1} parent=1 // pred_check
      _
    $region3: #{lstmnn_forward.1} parent=1 // pred_check_branch
      %9 = sbr.rel (0) target = $region5
    $region4: #{lstmnn_forward.1} parent=1 // pred_region
      _
    $region5: #{lstmnn_forward.1} parent=1 // pred_fallthru
      _
    // Predicated region
    $region6: #{lstmnn_forward.1} parent=1 // pred_check
      _
    $region7: #{lstmnn_forward.1} parent=1 // pred_check_branch
      %11 = sbr.rel (0) target = $region9
    $region8: #{lstmnn_forward.1} parent=1 // pred_region
      %s13 = ssub.s32 6144, 6144
      %14 = vsyncadd [#allocation3], %s13
      %s15 = sshll.u32 [#allocation2], 4
      %s16 = int_to_ptr.vmem [resolvable:$true] %s15
      %21 = dma.hbm_to_vmem [thread:$0]  %s1, 6144, %s16, [#allocation3], 512, 512, 32
    $region9: #{lstmnn_forward.1} parent=1 // pred_fallthru
      _
    // Predicated region
    $region10: #{lstmnn_forward.1} parent=1 // pred_check
      _
    $region11: #{lstmnn_forward.1} parent=1 // pred_check_branch
      %23 = sbr.rel (0) target = $region13
    $region12: #{lstmnn_forward.1} parent=1 // pred_region
      %24 = dma.done [#allocation3], 6144
    $region13: #{lstmnn_forward.1} parent=1 // pred_fallthru
      _
    %v25 = vld [vmem:[#allocation2] sm:$0xff]
    %v26 = vld [vmem:[#allocation2 + $0x20] sm:$0xff]
    %v27 = vld [vmem:[#allocation2 + $0x40] sm:$0xff]
    %v28 = vld [vmem:[#allocation2 + $0x60] sm:$0xff]
    %v29 = vld [vmem:[#allocation2 + $0x80] sm:$0xff]
    %v30 = vld [vmem:[#allocation2 + $0xa0] sm:$0xff]
    %v31 = vld [vmem:[#allocation2 + $0xc0] sm:$0xff]
    %v32 = vld [vmem:[#allocation2 + $0xe0] sm:$0xff]
    %v33 = vld [vmem:[#allocation2 + $0x100] sm:$0xff]
    %v34 = vld [vmem:[#allocation2 + $0x120] sm:$0xff]
    %v35 = vld [vmem:[#allocation2 + $0x140] sm:$0xff]
    %v36 = vld [vmem:[#allocation2 + $0x160] sm:$0xff]
    %v37 = vld [vmem:[%s0] sm:$0xff]
    %vm38 = vcmask 64512
    %v40 = vsel %vm38, %v25, 0
    %v43 = vsel %vm38, %v26, 0
    %v46 = vsel %vm38, %v27, 0
    %v49 = vsel %vm38, %v28, 0
    %v52 = vsel %vm38, %v29, 0
    %v55 = vsel %vm38, %v30, 0
    %v58 = vsel %vm38, %v31, 0
    %v61 = vsel %vm38, %v32, 0
    %v64 = vsel %vm38, %v33, 0
    %v67 = vsel %vm38, %v34, 0
    %v70 = vsel %vm38, %v35, 0
    %v73 = vsel %vm38, %v36, 0
    %75 = vmatprep.subr.mxu0 0.0
    %76 = vmatpush1.msra.mxu0 0.0
    %77 = vmatprep.subr.mxu0 0.0
    %78 = vmatpush1.msra.mxu0 0.0
    %79 = vmatprep.subr.mxu0 0.0
    %80 = vmatpush1.msra.mxu0 0.0
    %81 = vmatprep.subr.mxu0 0.0
    %82 = vmatpush1.msra.mxu0 0.0
    %83 = vmatprep.subr.mxu0 0.0
    %84 = vmatpush1.msra.mxu0 0.0
    %85 = vmatprep.subr.mxu0 0.0
    %86 = vmatpush1.msra.mxu0 0.0
    %87 = vmatprep.subr.mxu0 0.0
    %88 = vmatpush1.msra.mxu0 0.0
    %89 = vmatprep.subr.mxu0 0.0
    %90 = vmatpush1.msra.mxu0 0.0
    %91 = vmatprep.subr.mxu0 0.0
    %92 = vmatpush1.msra.mxu0 0.0
    %93 = vmatprep.subr.mxu0 0.0
    %94 = vmatpush1.msra.mxu0 0.0
    %95 = vmatprep.subr.mxu0 0.0
    %96 = vmatpush1.msra.mxu0 0.0
    %97 = vmatprep.subr.mxu0 0.0
    %98 = vmatpush1.msra.mxu0 0.0
    %99 = vmatprep.subr.mxu0 0.0
    %100 = vmatpush1.msra.mxu0 0.0
    %101 = vmatprep.subr.mxu0 0.0
    %102 = vmatpush1.msra.mxu0 0.0
    %103 = vmatprep.subr.mxu0 0.0
    %104 = vmatpush1.msra.mxu0 0.0
    %105 = vmatprep.subr.mxu0 0.0
    %106 = vmatpush1.msra.mxu0 %v37
    %107 = vmatprep.subr.mxu0 0.0
    %108 = vmatpush2.msra.mxu0 0.0
    %109 = vmatprep.subr.mxu0 0.0
    %110 = vmatpush2.msra.mxu0 0.0
    %111 = vmatprep.subr.mxu0 0.0
    %112 = vmatpush2.msra.mxu0 0.0
    %113 = vmatprep.subr.mxu0 0.0
    %114 = vmatpush2.msra.mxu0 0.0
    %115 = vmatprep.subr.mxu0 0.0
    %116 = vmatpush2.msra.mxu0 0.0
    %117 = vmatprep.subr.mxu0 0.0
    %118 = vmatpush2.msra.mxu0 0.0
    %119 = vmatprep.subr.mxu0 0.0
    %120 = vmatpush2.msra.mxu0 0.0
    %121 = vmatprep.subr.mxu0 0.0
    %122 = vmatpush2.msra.mxu0 0.0
    %123 = vmatprep.subr.mxu0 0.0
    %124 = vmatpush2.msra.mxu0 0.0
    %125 = vmatprep.subr.mxu0 0.0
    %126 = vmatpush2.msra.mxu0 0.0
    %127 = vmatprep.subr.mxu0 0.0
    %128 = vmatpush2.msra.mxu0 0.0
    %129 = vmatprep.subr.mxu0 0.0
    %130 = vmatpush2.msra.mxu0 0.0
    %131 = vmatprep.subr.mxu0 0.0
    %132 = vmatpush2.msra.mxu0 0.0
    %133 = vmatprep.subr.mxu0 0.0
    %134 = vmatpush2.msra.mxu0 0.0
    %135 = vmatprep.subr.mxu0 0.0
    %136 = vmatpush2.msra.mxu0 0.0
    %137 = vmatprep.subr.mxu0 0.0
    %138 = vmatpush2.msra.mxu0 0.0
    %139 = vmatprep.mubr.f32.mxu0 0.0
    %140 = vmatmul.mubr.f32.gmra.mxu0 %v40
    %v141 = vpop.f32.mrf.mxu0
    %v142 = vadd.f32 0.0, %v141
    %v143 = vpop.f32.mrf.mxu0
    %144 = vmatprep.mubr.f32.mxu0 0.0
    %145 = vmatmul.mubr.f32.gmra.mxu0 %v43
    %v146 = vpop.f32.mrf.mxu0
    %v147 = vadd.f32 0.0, %v146
    %v148 = vpop.f32.mrf.mxu0
    %149 = vmatprep.mubr.f32.mxu0 0.0
    %150 = vmatmul.mubr.f32.gmra.mxu0 %v46
    %v151 = vpop.f32.mrf.mxu0
    %v152 = vadd.f32 0.0, %v151
    %v153 = vpop.f32.mrf.mxu0
    %154 = vmatprep.mubr.f32.mxu0 0.0
    %155 = vmatmul.mubr.f32.gmra.mxu0 %v49
    %v156 = vpop.f32.mrf.mxu0
    %v157 = vadd.f32 0.0, %v156
    %v158 = vpop.f32.mrf.mxu0
    %159 = vmatprep.mubr.f32.mxu0 0.0
    %160 = vmatmul.mubr.f32.gmra.mxu0 %v52
    %v161 = vpop.f32.mrf.mxu0
    %v162 = vadd.f32 0.0, %v161
    %v163 = vpop.f32.mrf.mxu0
    %164 = vmatprep.mubr.f32.mxu0 0.0
    %165 = vmatmul.mubr.f32.gmra.mxu0 %v55
    %v166 = vpop.f32.mrf.mxu0
    %v167 = vadd.f32 0.0, %v166
    %v168 = vpop.f32.mrf.mxu0
    %169 = vmatprep.mubr.f32.mxu0 0.0
    %170 = vmatmul.mubr.f32.gmra.mxu0 %v58
    %v171 = vpop.f32.mrf.mxu0
    %v172 = vadd.f32 0.0, %v171
    %v173 = vpop.f32.mrf.mxu0
    %174 = vmatprep.mubr.f32.mxu0 0.0
    %175 = vmatmul.mubr.f32.gmra.mxu0 %v61
    %v176 = vpop.f32.mrf.mxu0
    %v177 = vadd.f32 0.0, %v176
    %v178 = vpop.f32.mrf.mxu0
    %179 = vmatprep.mubr.f32.mxu0 0.0
    %180 = vmatmul.mubr.f32.gmra.mxu0 %v64
    %v181 = vpop.f32.mrf.mxu0
    %v182 = vadd.f32 0.0, %v181
    %v183 = vpop.f32.mrf.mxu0
    %184 = vmatprep.mubr.f32.mxu0 0.0
    %185 = vmatmul.mubr.f32.gmra.mxu0 %v67
    %v186 = vpop.f32.mrf.mxu0
    %v187 = vadd.f32 0.0, %v186
    %v188 = vpop.f32.mrf.mxu0
    %189 = vmatprep.mubr.f32.mxu0 0.0
    %190 = vmatmul.mubr.f32.gmra.mxu0 %v70
    %v191 = vpop.f32.mrf.mxu0
    %v192 = vadd.f32 0.0, %v191
    %v193 = vpop.f32.mrf.mxu0
    %194 = vmatprep.mubr.f32.mxu0 0.0
    %195 = vmatmul.mubr.f32.gmra.mxu0 %v73
    %v196 = vpop.f32.mrf.mxu0
    %v197 = vadd.f32 0.0, %v196
    %v198 = vpop.f32.mrf.mxu0
    %199 = vdwg.mxu0
    %v200 = vmul.f32 %v142, 0.5
    %v201 = vmul.f32 %v147, 0.5
    %v202 = vmul.f32 %v152, 0.5
    %v203 = vmul.f32 %v157, 0.5
    %v204 = vtanh.pop %v200
    %v205 = vtanh.pop %v201
    %v206 = vtanh.pop %v202
    %v207 = vtanh.pop %v203
    %v208 = vadd.f32 %v204, 1.0
    %v209 = vadd.f32 %v205, 1.0
    %v210 = vadd.f32 %v206, 1.0
    %v211 = vadd.f32 %v207, 1.0
    %v212 = vmul.f32 %v208, 0.5
    %v213 = vmul.f32 %v209, 0.5
    %v214 = vmul.f32 %v210, 0.5
    %v215 = vmul.f32 %v211, 0.5
    %v216 = vtanh.pop %v162
    %v217 = vtanh.pop %v167
    %v218 = vtanh.pop %v172
    %v219 = vtanh.pop %v177
    %v220 = vmul.f32 %v182, 0.5
    %v221 = vmul.f32 %v187, 0.5
    %v222 = vmul.f32 %v192, 0.5
    %v223 = vmul.f32 %v197, 0.5
    %v224 = vtanh.pop %v220
    %v225 = vtanh.pop %v221
    %v226 = vtanh.pop %v222
    %v227 = vtanh.pop %v223
    %v228 = vadd.f32 %v224, 1.0
    %v229 = vadd.f32 %v225, 1.0
    %v230 = vadd.f32 %v226, 1.0
    %v231 = vadd.f32 %v227, 1.0
    %v232 = vmul.f32 %v228, 0.5
    %v233 = vmul.f32 %v229, 0.5
    %v234 = vmul.f32 %v230, 0.5
    %v235 = vmul.f32 %v231, 0.5
    %v236 = vmul.f32 %v212, %v216
    %v237 = vmul.f32 %v213, %v217
    %v238 = vmul.f32 %v214, %v218
    %v239 = vmul.f32 %v215, %v219
    %v240 = vtanh.pop %v236
    %v241 = vtanh.pop %v237
    %v242 = vtanh.pop %v238
    %v243 = vtanh.pop %v239
    %v244 = vmul.f32 %v232, %v240
    %v245 = vmul.f32 %v233, %v241
    %v246 = vmul.f32 %v234, %v242
    %v247 = vmul.f32 %v235, %v243
    %v248 = vld [vmem:[#allocation2 + $0x8] sm:$0xff]
    %v249 = vld [vmem:[#allocation2 + $0x28] sm:$0xff]
    %v250 = vld [vmem:[#allocation2 + $0x48] sm:$0xff]
    %v251 = vld [vmem:[#allocation2 + $0x68] sm:$0xff]
    %v252 = vld [vmem:[#allocation2 + $0x88] sm:$0xff]
    %v253 = vld [vmem:[#allocation2 + $0xa8] sm:$0xff]
    %v254 = vld [vmem:[#allocation2 + $0xc8] sm:$0xff]
    %v255 = vld [vmem:[#allocation2 + $0xe8] sm:$0xff]
    %v256 = vld [vmem:[#allocation2 + $0x108] sm:$0xff]
    %v257 = vld [vmem:[#allocation2 + $0x128] sm:$0xff]
    %v258 = vld [vmem:[#allocation2 + $0x148] sm:$0xff]
    %v259 = vld [vmem:[#allocation2 + $0x168] sm:$0xff]
    %v260 = vld [vmem:[#allocation2 + $0x10] sm:$0xff]
    %v261 = vld [vmem:[#allocation2 + $0x30] sm:$0xff]
    %v262 = vld [vmem:[#allocation2 + $0x50] sm:$0xff]
    %v263 = vld [vmem:[#allocation2 + $0x70] sm:$0xff]
    %v264 = vld [vmem:[#allocation2 + $0x90] sm:$0xff]
    %v265 = vld [vmem:[#allocation2 + $0xb0] sm:$0xff]
    %v266 = vld [vmem:[#allocation2 + $0xd0] sm:$0xff]
    %v267 = vld [vmem:[#allocation2 + $0xf0] sm:$0xff]
    %v268 = vld [vmem:[#allocation2 + $0x110] sm:$0xff]
    %v269 = vld [vmem:[#allocation2 + $0x130] sm:$0xff]
    %v270 = vld [vmem:[#allocation2 + $0x150] sm:$0xff]
    %v271 = vld [vmem:[#allocation2 + $0x170] sm:$0xff]
    %273 = vset.pattern.permute.xlu0 0
    %274 = vperm.xlu0 %273, %v260
    %v275 = vpop.permute.xlu0 %274
    %278 = vset.pattern.permute.xlu0 0
    %279 = vperm.xlu0 %278, %v261
    %v280 = vpop.permute.xlu0 %279
    %283 = vset.pattern.permute.xlu0 0
    %284 = vperm.xlu0 %283, %v262
    %v285 = vpop.permute.xlu0 %284
    %288 = vset.pattern.permute.xlu0 0
    %289 = vperm.xlu0 %288, %v263
    %v290 = vpop.permute.xlu0 %289
    %293 = vset.pattern.permute.xlu0 0
    %294 = vperm.xlu0 %293, %v264
    %v295 = vpop.permute.xlu0 %294
    %298 = vset.pattern.permute.xlu0 0
    %299 = vperm.xlu0 %298, %v265
    %v300 = vpop.permute.xlu0 %299
    %303 = vset.pattern.permute.xlu0 0
    %304 = vperm.xlu0 %303, %v266
    %v305 = vpop.permute.xlu0 %304
    %308 = vset.pattern.permute.xlu0 0
    %309 = vperm.xlu0 %308, %v267
    %v310 = vpop.permute.xlu0 %309
    %313 = vset.pattern.permute.xlu0 0
    %314 = vperm.xlu0 %313, %v268
    %v315 = vpop.permute.xlu0 %314
    %318 = vset.pattern.permute.xlu0 0
    %319 = vperm.xlu0 %318, %v269
    %v320 = vpop.permute.xlu0 %319
    %323 = vset.pattern.permute.xlu0 0
    %324 = vperm.xlu0 %323, %v270
    %v325 = vpop.permute.xlu0 %324
    %328 = vset.pattern.permute.xlu0 0
    %329 = vperm.xlu0 %328, %v271
    %v330 = vpop.permute.xlu0 %329
    %vm332 = vcmask 261120
    %v334 = vsel %vm332, %v248, 0
    %v337 = vsel %vm332, %v249, 0
    %v340 = vsel %vm332, %v250, 0
    %v343 = vsel %vm332, %v251, 0
    %v346 = vsel %vm332, %v252, 0
    %v349 = vsel %vm332, %v253, 0
    %v352 = vsel %vm332, %v254, 0
    %v355 = vsel %vm332, %v255, 0
    %v358 = vsel %vm332, %v256, 0
    %v361 = vsel %vm332, %v257, 0
    %v364 = vsel %vm332, %v258, 0
    %v367 = vsel %vm332, %v259, 0
    %369 = vmatprep.subr.mxu0 0.0
    %370 = vmatpush1.msra.mxu0 0.0
    %371 = vmatprep.subr.mxu0 0.0
    %372 = vmatpush1.msra.mxu0 0.0
    %373 = vmatprep.subr.mxu0 0.0
    %374 = vmatpush1.msra.mxu0 0.0
    %375 = vmatprep.subr.mxu0 0.0
    %376 = vmatpush1.msra.mxu0 0.0
    %377 = vmatprep.subr.mxu0 0.0
    %378 = vmatpush1.msra.mxu0 0.0
    %379 = vmatprep.subr.mxu0 0.0
    %380 = vmatpush1.msra.mxu0 0.0
    %381 = vmatprep.subr.mxu0 0.0
    %382 = vmatpush1.msra.mxu0 0.0
    %383 = vmatprep.subr.mxu0 0.0
    %384 = vmatpush1.msra.mxu0 0.0
    %385 = vmatprep.subr.mxu0 0.0
    %386 = vmatpush1.msra.mxu0 0.0
    %387 = vmatprep.subr.mxu0 0.0
    %388 = vmatpush1.msra.mxu0 0.0
    %389 = vmatprep.subr.mxu0 0.0
    %390 = vmatpush1.msra.mxu0 0.0
    %391 = vmatprep.subr.mxu0 0.0
    %392 = vmatpush1.msra.mxu0 0.0
    %393 = vmatprep.subr.mxu0 0.0
    %394 = vmatpush1.msra.mxu0 %v247
    %395 = vmatprep.subr.mxu0 0.0
    %396 = vmatpush1.msra.mxu0 %v246
    %397 = vmatprep.subr.mxu0 0.0
    %398 = vmatpush1.msra.mxu0 %v245
    %399 = vmatprep.subr.mxu0 0.0
    %400 = vmatpush1.msra.mxu0 %v244
    %401 = vmatprep.subr.mxu0 0.0
    %402 = vmatpush2.msra.mxu0 0.0
    %403 = vmatprep.subr.mxu0 0.0
    %404 = vmatpush2.msra.mxu0 0.0
    %405 = vmatprep.subr.mxu0 0.0
    %406 = vmatpush2.msra.mxu0 0.0
    %407 = vmatprep.subr.mxu0 0.0
    %408 = vmatpush2.msra.mxu0 0.0
    %409 = vmatprep.subr.mxu0 0.0
    %410 = vmatpush2.msra.mxu0 0.0
    %411 = vmatprep.subr.mxu0 0.0
    %412 = vmatpush2.msra.mxu0 0.0
    %413 = vmatprep.subr.mxu0 0.0
    %414 = vmatpush2.msra.mxu0 0.0
    %415 = vmatprep.subr.mxu0 0.0
    %416 = vmatpush2.msra.mxu0 0.0
    %417 = vmatprep.subr.mxu0 0.0
    %418 = vmatpush2.msra.mxu0 0.0
    %419 = vmatprep.subr.mxu0 0.0
    %420 = vmatpush2.msra.mxu0 0.0
    %421 = vmatprep.subr.mxu0 0.0
    %422 = vmatpush2.msra.mxu0 0.0
    %423 = vmatprep.subr.mxu0 0.0
    %424 = vmatpush2.msra.mxu0 0.0
    %425 = vmatprep.subr.mxu0 0.0
    %426 = vmatpush2.msra.mxu0 0.0
    %427 = vmatprep.subr.mxu0 0.0
    %428 = vmatpush2.msra.mxu0 0.0
    %429 = vmatprep.subr.mxu0 0.0
    %430 = vmatpush2.msra.mxu0 0.0
    %431 = vmatprep.subr.mxu0 0.0
    %432 = vmatpush2.msra.mxu0 0.0
    %433 = vmatprep.mubr.f32.mxu0 0.0
    %434 = vmatmul.mubr.f32.gmra.mxu0 %v334
    %v435 = vpop.f32.mrf.mxu0
    %v436 = vadd.f32 %v275, %v435
    %v437 = vpop.f32.mrf.mxu0
    %438 = vmatprep.mubr.f32.mxu0 0.0
    %439 = vmatmul.mubr.f32.gmra.mxu0 %v337
    %v440 = vpop.f32.mrf.mxu0
    %v441 = vadd.f32 %v280, %v440
    %v442 = vpop.f32.mrf.mxu0
    %443 = vmatprep.mubr.f32.mxu0 0.0
    %444 = vmatmul.mubr.f32.gmra.mxu0 %v340
    %v445 = vpop.f32.mrf.mxu0
    %v446 = vadd.f32 %v285, %v445
    %v447 = vpop.f32.mrf.mxu0
    %448 = vmatprep.mubr.f32.mxu0 0.0
    %449 = vmatmul.mubr.f32.gmra.mxu0 %v343
    %v450 = vpop.f32.mrf.mxu0
    %v451 = vadd.f32 %v290, %v450
    %v452 = vpop.f32.mrf.mxu0
    %453 = vmatprep.mubr.f32.mxu0 0.0
    %454 = vmatmul.mubr.f32.gmra.mxu0 %v346
    %v455 = vpop.f32.mrf.mxu0
    %v456 = vadd.f32 %v295, %v455
    %v457 = vpop.f32.mrf.mxu0
    %458 = vmatprep.mubr.f32.mxu0 0.0
    %459 = vmatmul.mubr.f32.gmra.mxu0 %v349
    %v460 = vpop.f32.mrf.mxu0
    %v461 = vadd.f32 %v300, %v460
    %v462 = vpop.f32.mrf.mxu0
    %463 = vmatprep.mubr.f32.mxu0 0.0
    %464 = vmatmul.mubr.f32.gmra.mxu0 %v352
    %v465 = vpop.f32.mrf.mxu0
    %v466 = vadd.f32 %v305, %v465
    %v467 = vpop.f32.mrf.mxu0
    %468 = vmatprep.mubr.f32.mxu0 0.0
    %469 = vmatmul.mubr.f32.gmra.mxu0 %v355
    %v470 = vpop.f32.mrf.mxu0
    %v471 = vadd.f32 %v310, %v470
    %v472 = vpop.f32.mrf.mxu0
    %473 = vmatprep.mubr.f32.mxu0 0.0
    %474 = vmatmul.mubr.f32.gmra.mxu0 %v358
    %v475 = vpop.f32.mrf.mxu0
    %v476 = vadd.f32 %v315, %v475
    %v477 = vpop.f32.mrf.mxu0
    %478 = vmatprep.mubr.f32.mxu0 0.0
    %479 = vmatmul.mubr.f32.gmra.mxu0 %v361
    %v480 = vpop.f32.mrf.mxu0
    %v481 = vadd.f32 %v320, %v480
    %v482 = vpop.f32.mrf.mxu0
    %483 = vmatprep.mubr.f32.mxu0 0.0
    %484 = vmatmul.mubr.f32.gmra.mxu0 %v364
    %v485 = vpop.f32.mrf.mxu0
    %v486 = vadd.f32 %v325, %v485
    %v487 = vpop.f32.mrf.mxu0
    %488 = vmatprep.mubr.f32.mxu0 0.0
    %489 = vmatmul.mubr.f32.gmra.mxu0 %v367
    %v490 = vpop.f32.mrf.mxu0
    %v491 = vadd.f32 %v330, %v490
    %v492 = vpop.f32.mrf.mxu0
    %493 = vdwg.mxu0
    %v494 = vmul.f32 %v436, 0.5
    %v495 = vmul.f32 %v441, 0.5
    %v496 = vmul.f32 %v446, 0.5
    %v497 = vmul.f32 %v451, 0.5
    %v498 = vtanh.pop %v494
    %v499 = vtanh.pop %v495
    %v500 = vtanh.pop %v496
    %v501 = vtanh.pop %v497
    %v502 = vadd.f32 %v498, 1.0
    %v503 = vadd.f32 %v499, 1.0
    %v504 = vadd.f32 %v500, 1.0
    %v505 = vadd.f32 %v501, 1.0
    %v506 = vmul.f32 %v502, 0.5
    %v507 = vmul.f32 %v503, 0.5
    %v508 = vmul.f32 %v504, 0.5
    %v509 = vmul.f32 %v505, 0.5
    %v510 = vtanh.pop %v456
    %v511 = vtanh.pop %v461
    %v512 = vtanh.pop %v466
    %v513 = vtanh.pop %v471
    %v514 = vmul.f32 %v476, 0.5
    %v515 = vmul.f32 %v481, 0.5
    %v516 = vmul.f32 %v486, 0.5
    %v517 = vmul.f32 %v491, 0.5
    %v518 = vtanh.pop %v514
    %v519 = vtanh.pop %v515
    %v520 = vtanh.pop %v516
    %v521 = vtanh.pop %v517
    %v522 = vadd.f32 %v518, 1.0
    %v523 = vadd.f32 %v519, 1.0
    %v524 = vadd.f32 %v520, 1.0
    %v525 = vadd.f32 %v521, 1.0
    %v526 = vmul.f32 %v522, 0.5
    %v527 = vmul.f32 %v523, 0.5
    %v528 = vmul.f32 %v524, 0.5
    %v529 = vmul.f32 %v525, 0.5
    %v530 = vmul.f32 %v506, %v510
    %v531 = vmul.f32 %v507, %v511
    %v532 = vmul.f32 %v508, %v512
    %v533 = vmul.f32 %v509, %v513
    %v534 = vtanh.pop %v530
    %v535 = vtanh.pop %v531
    %v536 = vtanh.pop %v532
    %v537 = vtanh.pop %v533
    %v538 = vmul.f32 %v526, %v534
    %v539 = vmul.f32 %v527, %v535
    %v540 = vmul.f32 %v528, %v536
    %v541 = vmul.f32 %v529, %v537
    %v542 = vld [vmem:[#allocation2 + $0x18] sm:$0xff]
    %v543 = vld [vmem:[#allocation2 + $0x38] sm:$0xff]
    %v544 = vld [vmem:[#allocation2 + $0x58] sm:$0xff]
    %v545 = vld [vmem:[#allocation2 + $0x78] sm:$0xff]
    %v546 = vld [vmem:[#allocation2 + $0x98] ss:$0 sm:$0xff]
    %548 = vset.pattern.permute.xlu0 0
    %549 = vperm.xlu0 %548, %v542
    %v550 = vpop.permute.xlu0 %549
    %553 = vset.pattern.permute.xlu0 0
    %554 = vperm.xlu0 %553, %v543
    %v555 = vpop.permute.xlu0 %554
    %558 = vset.pattern.permute.xlu0 0
    %559 = vperm.xlu0 %558, %v544
    %v560 = vpop.permute.xlu0 %559
    %563 = vset.pattern.permute.xlu0 0
    %564 = vperm.xlu0 %563, %v545
    %v565 = vpop.permute.xlu0 %564
    %v567 = vmul.f32 %v538, %v550
    %v568 = vmul.f32 %v539, %v555
    %v569 = vmul.f32 %v540, %v560
    %v570 = vmul.f32 %v541, %v565
    %v571 = vadd.f32 %v567, %v568
    %v572 = vadd.f32 %v571, %v569
    %v573 = vadd.f32 %v572, %v570
    %v574 = vrot.slane %v573, 4
    %v575 = vadd.f32 %v573, %v574
    %v576 = vrot.slane %v575, 2
    %v577 = vadd.f32 %v575, %v576
    %v578 = vrot.slane %v577, 1
    %v579 = vadd.f32 %v577, %v578
    %581 = vset.pattern.permute.xlu0 0
    %582 = vperm.xlu0 %581, %v546
    %v583 = vpop.permute.xlu0 %582
    %v585 = vadd.f32 %v579, %v583
    %586 = vst [vmem:[%s2] sm:$0x1] %v585
    // Predicated region
    $region14: #{lstmnn_forward.1} parent=1 // pred_check
      _
    $region15: #{lstmnn_forward.1} parent=1 // pred_check_branch
      %588 = sbr.rel (0) target = $region17
    $region16: #{lstmnn_forward.1} parent=1 // pred_region
      _
    $region17: #{lstmnn_forward.1} parent=1 // pred_fallthru
      _
    // Predicated region
    $region18: #{lstmnn_forward.1} parent=1 // pred_check
      _
    $region19: #{lstmnn_forward.1} parent=1 // pred_check_branch
      %590 = sbr.rel (0) target = $region21
    $region20: #{lstmnn_forward.1} parent=1 // pred_region
      _
    $region21: #{lstmnn_forward.1} parent=1 // pred_fallthru
      _
    %591 = vsyncpa [#allocation3], 1

</llo_original>
